<compile_context>
chip_gen: v7x
topology: tpu7x:2x2x1
jax: 0.10.0
libtpu: 0.0.40
codegen_flags: <defaults>
</compile_context>

<pallas_src>
import jax
import jax.numpy as jnp
from jax.experimental import pallas as pl
from jax.experimental.pallas import tpu as pltpu

EPS = 1e-12


def _round_up(n, m):
    return ((n + m - 1) // m) * m


def _pick_tile(padded, candidates):
    for c in candidates:
        if padded % c == 0:
            return c
    return padded


# ---------------------------------------------------------------- phase 1 ---
def power_iteration_kernel(w_ref, u_ref, u_out_ref, v_out_ref, sigma_ref,
                           inv_sigma_ref):
    # Power-iteration reductions and sigma stay in f32 (two small matvecs).
    # TODO(synk): tile these matvecs over Din (grid + emit_pipeline) for
    # weights too large for a single VMEM block (bites first on v7x's 64 MiB).
    w = w_ref[...].astype(jnp.float32)           # (H, Din)
    u = u_ref[...].astype(jnp.float32)           # (1, H)

    # v = l2normalize(W^T u)
    wt_u = jnp.dot(u, w, preferred_element_type=jnp.float32)              # (1, Din)
    inv_nv = 1.0 / (jnp.sqrt(jnp.sum(wt_u * wt_u)) + EPS)
    v = wt_u * inv_nv

    # u_new = l2normalize(W v)   (contraction LHS-last x RHS-last == W v)
    w_v = jax.lax.dot_general(v, w, (((1,), (1,)), ((), ())),
                              preferred_element_type=jnp.float32)          # (1, H)
    s = jnp.sum(w_v * w_v)                       # reused below -> no extra reduction
    inv_nu = 1.0 / (jnp.sqrt(s) + EPS)
    u_new = w_v * inv_nu

    # sigma = u_new . (W v) == s * inv_nu  (identical value, one less XLU pass)
    sigma = s * inv_nu
    inv_sigma = 1.0 / sigma                      # exact divide, computed ONCE here

    u_out_ref[...] = u_new.astype(u_out_ref.dtype)
    v_out_ref[...] = v.astype(v_out_ref.dtype)
    sigma_ref[...] = jnp.full(sigma_ref.shape, sigma, dtype=sigma_ref.dtype)
    inv_sigma_ref[...] = jnp.full(inv_sigma_ref.shape, inv_sigma,
                                  dtype=inv_sigma_ref.dtype)


# ---------------------------------------------------------------- phase 2 ---
def _gemm_body(x_ref, w_ref):
    # x tile (tb, tk) x W tile (th, tk), contracting the shared K axis:
    # transposed-B matmul straight on the MXU -- W is never transposed in HBM.
    return jax.lax.dot_general(x_ref[...], w_ref[...],
                               (((1,), (1,)), ((), ())),
                               preferred_element_type=jnp.float32)


def sn_linear_gemm_kernel_f32(inv_sigma_ref, x_ref, w_ref, b_ref, y_ref):
    # f32 output: accumulate directly into the resident output block
    # (its (i, j) block index is constant across k) -- no scratch, no copy.
    k = pl.program_id(2)

    @pl.when(k == 0)
    def _():
        y_ref[...] = jnp.zeros_like(y_ref)

    y_ref[...] += _gemm_body(x_ref, w_ref)

    @pl.when(k == pl.num_programs(2) - 1)
    def _():
        inv_sigma = inv_sigma_ref[0, 0]                       # scalar from SMEM
        y_ref[...] = y_ref[...] * inv_sigma + b_ref[...].astype(jnp.float32)


def sn_linear_gemm_kernel_acc(inv_sigma_ref, x_ref, w_ref, b_ref, y_ref, acc_ref):
    # Narrow output dtypes (bf16/fp8): keep an f32 accumulator scratch.
    k = pl.program_id(2)

    @pl.when(k == 0)
    def _():
        acc_ref[...] = jnp.zeros_like(acc_ref)

    acc_ref[...] += _gemm_body(x_ref, w_ref)

    @pl.when(k == pl.num_programs(2) - 1)
    def _():
        inv_sigma = inv_sigma_ref[0, 0]                       # scalar from SMEM
        y = acc_ref[...] * inv_sigma + b_ref[...].astype(jnp.float32)
        y_ref[...] = y.astype(y_ref.dtype)


# ---------------------------------------------------------------- wrapper ---
@jax.jit
def spectral_norm_linear(x, w_bar, u, b):
    """SpectralNorm(nn.Linear).forward(x).  Returns (y, u_new, v_new, sigma)."""
    B, Din = x.shape
    H = w_bar.shape[0]
    b = b.reshape(1, -1)

    vmem = pl.BlockSpec(memory_space=pltpu.MemorySpace.VMEM)
    smem = pl.BlockSpec(memory_space=pltpu.MemorySpace.SMEM)

    # ---- phase 1: one read of W -> u_new, v, sigma, 1/sigma -----------------
    u_new, v_new, sigma, inv_sigma = pl.pallas_call(
        power_iteration_kernel,
        out_shape=(
            jax.ShapeDtypeStruct((1, H), jnp.float32),     # updated u
            jax.ShapeDtypeStruct((1, Din), jnp.float32),   # updated v
            jax.ShapeDtypeStruct((1, 1), jnp.float32),     # sigma
            jax.ShapeDtypeStruct((1, 1), jnp.float32),     # 1 / sigma
        ),
        in_specs=[vmem, vmem],
        out_specs=(vmem, vmem, vmem, vmem),
        compiler_params=pltpu.CompilerParams(
            vmem_limit_bytes=32 * 1024 * 1024),
    )(w_bar, u)

    # ---- phase 2: tiled GEMM  y = (x @ W^T) * (1/sigma) + b ------------------
    # W (H, Din) is tiled as (th, tk) blocks and contracted transposed on the
    # MXU -- no wrapper-side transpose / extra HBM pass over W.
    itemsize = jnp.dtype(x.dtype).itemsize
    pack = max(8, 32 // itemsize)                 # sublane packing: 8/16/32 rows

    # Pad K/H to multiples of 256 (full-width passes on the 2x256^2 MXU).
    K_pad = _round_up(Din, 256)
    H_pad = _round_up(H, 256)
    th = _pick_tile(H_pad, (512, 256))

    if B < 128:
        # Small-B / decode path: tiny x tile, maximize the K tile (W-BW bound).
        B_pad = _round_up(B, pack)
        tb = B_pad
        tk = _pick_tile(K_pad, (1024, 512, 256))
    else:
        B_pad = _round_up(B, 128)
        tb = _pick_tile(B_pad, (512, 256, 128))
        tk = _pick_tile(K_pad, (512, 256))

    x_p = x if (B_pad, K_pad) == (B, Din) else jnp.pad(
        x, ((0, B_pad - B), (0, K_pad - Din)))
    w_p = w_bar if (H_pad, K_pad) == (H, Din) else jnp.pad(
        w_bar, ((0, H_pad - H), (0, K_pad - Din)))
    b_p = b if H_pad == H else jnp.pad(b, ((0, 0), (0, H_pad - H)))

    grid = (B_pad // tb, H_pad // th, K_pad // tk)

    out_f32 = (x.dtype == jnp.float32)
    kernel = sn_linear_gemm_kernel_f32 if out_f32 else sn_linear_gemm_kernel_acc
    scratch = [] if out_f32 else [pltpu.VMEM((tb, th), jnp.float32)]

    y_p = pl.pallas_call(
        kernel,
        out_shape=jax.ShapeDtypeStruct((B_pad, H_pad), x.dtype),
        grid_spec=pltpu.PrefetchScalarGridSpec(
            num_scalar_prefetch=0,
            grid=grid,
            in_specs=[
                smem,                                              # 1/sigma (SMEM)
                pl.BlockSpec((tb, tk), lambda i, j, k: (i, k)),    # x tile
                pl.BlockSpec((th, tk), lambda i, j, k: (j, k)),    # W tile (no T)
                pl.BlockSpec((1, th), lambda i, j, k: (0, j)),     # bias tile
            ],
            out_specs=pl.BlockSpec((tb, th), lambda i, j, k: (i, j)),
            scratch_shapes=scratch,
        ),
        compiler_params=pltpu.CompilerParams(
            # B/H tiles independent (megacore shard); K is the reduction.
            dimension_semantics=("parallel", "parallel", "arbitrary"),
            # Tiles stay a few MiB; 32 MiB leaves headroom on v7x (64 MiB/TC).
            vmem_limit_bytes=32 * 1024 * 1024,
        ),
    )(inv_sigma, x_p, w_p, b_p)

    # TODO(synk): for mem-bound small-B shapes, fold this crop into the edge
    # tile via a masked store instead of a post-kernel slice.
    y = y_p if (B_pad, H_pad) == (B, H) else y_p[:B, :H]
    return y, u_new, v_new, sigma


def _reference(x, w, u, b):
    # pure-JAX mirror of SpectralNorm._update_u_v + nn.Linear forward
    wt_u = u @ w                                    # (1, Din)
    v = wt_u / (jnp.linalg.norm(wt_u) + EPS)
    w_v = v @ w.T                                   # (1, H)
    u_new = w_v / (jnp.linalg.norm(w_v) + EPS)
    sigma = jnp.sum(u_new * w_v)
    y = x @ (w / sigma).T + b
    return y, u_new, v, sigma


if __name__ == "__main__":
    key = jax.random.PRNGKey(0)
    k_x, k_w, k_b, k_u, k_v = jax.random.split(key, 5)

    batch, in_features, out_features = 8, 32, 16

    x = jax.random.normal(k_x, (batch, in_features), dtype=jnp.float32)
    # weight_bar of the wrapped nn.Linear(in_features, out_features): shape (out, in)
    w_bar = jax.random.normal(k_w, (out_features, in_features), dtype=jnp.float32) * 0.1
    bias = jax.random.normal(k_b, (1, out_features), dtype=jnp.float32) * 0.01
    # u, v buffers: normal(0,1) then l2-normalized, as in _make_params
    u0 = jax.random.normal(k_u, (1, out_features), dtype=jnp.float32)
    u0 = u0 / (jnp.linalg.norm(u0) + EPS)
    v0 = jax.random.normal(k_v, (1, in_features), dtype=jnp.float32)
    v0 = v0 / (jnp.linalg.norm(v0) + EPS)  # overwritten by the first power iteration

    y, u_new, v_new, sigma = jax.block_until_ready(
        spectral_norm_linear(x, w_bar, u0, bias))

    y_ref, u_ref, v_ref, sigma_ref = _reference(x, w_bar, u0, bias)
    assert jnp.allclose(y, y_ref, rtol=1e-5, atol=1e-5)
    assert jnp.allclose(u_new, u_ref, rtol=1e-5, atol=1e-5)
    assert jnp.allclose(v_new, v_ref, rtol=1e-5, atol=1e-5)
    assert jnp.allclose(sigma[0, 0], sigma_ref, rtol=1e-5, atol=1e-5)

    print("KERNEL_OK")
</pallas_src>

<mosaic_0001>
module attributes {stable_mosaic.version = 11 : i64} {
  func.func @power_iteration_kernel(%arg0: memref<16x32xf32, #tpu.memory_space<vmem>>, %arg1: memref<1x16xf32, #tpu.memory_space<vmem>>, %arg2: memref<1x16xf32, #tpu.memory_space<vmem>>, %arg3: memref<1x32xf32, #tpu.memory_space<vmem>>, %arg4: memref<1x1xf32, #tpu.memory_space<vmem>>, %arg5: memref<1x1xf32, #tpu.memory_space<vmem>>) attributes {dimension_semantics = [], scalar_prefetch = 0 : i64, scratch_operands = 0 : i64, tpu.core_type = #tpu.core_type<tc>} {
    %c0 = arith.constant 0 : index
    %c0_0 = arith.constant 0 : index
    %0 = vector.load %arg0[%c0, %c0_0] : memref<16x32xf32, #tpu.memory_space<vmem>>, vector<16x32xf32>
    %c0_1 = arith.constant 0 : index
    %c0_2 = arith.constant 0 : index
    %1 = vector.load %arg1[%c0_1, %c0_2] : memref<1x16xf32, #tpu.memory_space<vmem>>, vector<1x16xf32>
    %cst = arith.constant dense<0.000000e+00> : vector<1x32xf32>
    %2 = tpu.matmul %1, %0, %cst {dimension_numbers = #tpu.dot_dimension_numbers<[1], [0], [0], [1], [0, 0, 1, 1], [], []>} : vector<1x16xf32>, vector<16x32xf32>, vector<1x32xf32> -> vector<1x32xf32>
    %3 = arith.mulf %2, %2 : vector<1x32xf32>
    %4 = vector.shape_cast %3 : vector<1x32xf32> to vector<1x1x32xf32>
    %cst_3 = arith.constant dense<0.000000e+00> : vector<1xf32>
    %5 = vector.multi_reduction <add>, %4, %cst_3 [1, 2] : vector<1x1x32xf32> to vector<1xf32>
    %6 = vector.shape_cast %5 : vector<1xf32> to vector<1x1x1xf32>
    %7 = vector.extract %6[0, 0, 0] : f32 from vector<1x1x1xf32>
    %8 = math.sqrt %7 : f32
    %cst_4 = arith.constant 9.99999996E-13 : f32
    %9 = arith.addf %8, %cst_4 : f32
    %cst_5 = arith.constant 1.000000e+00 : f32
    %10 = arith.divf %cst_5, %9 : f32
    %11 = vector.broadcast %10 : f32 to vector<1x32xf32>
    %12 = arith.mulf %2, %11 : vector<1x32xf32>
    %cst_6 = arith.constant dense<0.000000e+00> : vector<1x16xf32>
    %13 = tpu.matmul %12, %0, %cst_6 {dimension_numbers = #tpu.dot_dimension_numbers<[1], [1], [0], [0], [0, 0, 1, 0], [], []>} : vector<1x32xf32>, vector<16x32xf32>, vector<1x16xf32> -> vector<1x16xf32>
    %14 = arith.mulf %13, %13 : vector<1x16xf32>
    %15 = vector.shape_cast %14 : vector<1x16xf32> to vector<1x1x16xf32>
    %cst_7 = arith.constant dense<0.000000e+00> : vector<1xf32>
    %16 = vector.multi_reduction <add>, %15, %cst_7 [1, 2] : vector<1x1x16xf32> to vector<1xf32>
    %17 = vector.shape_cast %16 : vector<1xf32> to vector<1x1x1xf32>
    %18 = vector.extract %17[0, 0, 0] : f32 from vector<1x1x1xf32>
    %19 = math.sqrt %18 : f32
    %cst_8 = arith.constant 9.99999996E-13 : f32
    %20 = arith.addf %19, %cst_8 : f32
    %cst_9 = arith.constant 1.000000e+00 : f32
    %21 = arith.divf %cst_9, %20 : f32
    %22 = vector.broadcast %21 : f32 to vector<1x16xf32>
    %23 = arith.mulf %13, %22 : vector<1x16xf32>
    %24 = arith.mulf %18, %21 : f32
    %cst_10 = arith.constant 1.000000e+00 : f32
    %25 = arith.divf %cst_10, %24 : f32
    %c0_11 = arith.constant 0 : index
    %c0_12 = arith.constant 0 : index
    %26 = vector.load %arg2[%c0_11, %c0_12] : memref<1x16xf32, #tpu.memory_space<vmem>>, vector<1x16xf32>
    tpu.vector_store %arg2[%c0_11, %c0_12], %23 {strides = array<i32>} : memref<1x16xf32, #tpu.memory_space<vmem>>, vector<1x16xf32>,
    %c0_13 = arith.constant 0 : index
    %c0_14 = arith.constant 0 : index
    %27 = vector.load %arg3[%c0_13, %c0_14] : memref<1x32xf32, #tpu.memory_space<vmem>>, vector<1x32xf32>
    tpu.vector_store %arg3[%c0_13, %c0_14], %12 {strides = array<i32>} : memref<1x32xf32, #tpu.memory_space<vmem>>, vector<1x32xf32>,
    %28 = vector.broadcast %24 : f32 to vector<1x1xf32>
    %c0_15 = arith.constant 0 : index
    %c0_16 = arith.constant 0 : index
    %29 = vector.load %arg4[%c0_15, %c0_16] : memref<1x1xf32, #tpu.memory_space<vmem>>, vector<1x1xf32>
    tpu.vector_store %arg4[%c0_15, %c0_16], %28 {strides = array<i32>} : memref<1x1xf32, #tpu.memory_space<vmem>>, vector<1x1xf32>,
    %30 = vector.broadcast %25 : f32 to vector<1x1xf32>
    %c0_17 = arith.constant 0 : index
    %c0_18 = arith.constant 0 : index
    %31 = vector.load %arg5[%c0_17, %c0_18] : memref<1x1xf32, #tpu.memory_space<vmem>>, vector<1x1xf32>
    tpu.vector_store %arg5[%c0_17, %c0_18], %30 {strides = array<i32>} : memref<1x1xf32, #tpu.memory_space<vmem>>, vector<1x1xf32>,
    return
  }
}

module attributes {stable_mosaic.version = 11 : i64} {
  func.func @sn_linear_gemm_kernel_f32(%arg0: i32, %arg1: i32, %arg2: i32, %arg3: memref<1x1xf32, #tpu.memory_space<smem>>, %arg4: memref<8x256xf32, #tpu.memory_space<vmem>>, %arg5: memref<256x256xf32, #tpu.memory_space<vmem>>, %arg6: memref<1x256xf32, #tpu.memory_space<vmem>>, %arg7: memref<8x256xf32, #tpu.memory_space<vmem>>) attributes {dimension_semantics = [#tpu.dimension_semantics<parallel>, #tpu.dimension_semantics<parallel>, #tpu.dimension_semantics<arbitrary>], iteration_bounds = array<i64: 1, 1, 1>, scalar_prefetch = 0 : i64, scratch_operands = 0 : i64, tpu.core_type = #tpu.core_type<tc>, window_params = [{transform_indices = @transform_0, window_bounds = array<i64: 1, 1>}, {transform_indices = @transform_1, window_bounds = array<i64: 8, 256>}, {transform_indices = @transform_2, window_bounds = array<i64: 256, 256>}, {transform_indices = @transform_3, window_bounds = array<i64: 1, 256>}, {transform_indices = @transform_4, window_bounds = array<i64: 8, 256>}]} {
    %c0_i32 = arith.constant 0 : i32
    %0 = arith.cmpi eq, %arg2, %c0_i32 : i32
    %1 = arith.extui %0 : i1 to i32
    %c0_i32_0 = arith.constant 0 : i32
    %2 = arith.cmpi ne, %1, %c0_i32_0 : i32
    scf.if %2 {
      %cst_10 = arith.constant 0.000000e+00 : f32
      %12 = vector.broadcast %cst_10 : f32 to vector<8x256xf32>
      %c0_11 = arith.constant 0 : index
      %c0_12 = arith.constant 0 : index
      %13 = vector.load %arg7[%c0_11, %c0_12] : memref<8x256xf32, #tpu.memory_space<vmem>>, vector<8x256xf32>
      tpu.vector_store %arg7[%c0_11, %c0_12], %12 {strides = array<i32>} : memref<8x256xf32, #tpu.memory_space<vmem>>, vector<8x256xf32>,
    } else {
    }
    %c0 = arith.constant 0 : index
    %c0_1 = arith.constant 0 : index
    %3 = vector.load %arg7[%c0, %c0_1] : memref<8x256xf32, #tpu.memory_space<vmem>>, vector<8x256xf32>
    %c0_2 = arith.constant 0 : index
    %c0_3 = arith.constant 0 : index
    %4 = vector.load %arg4[%c0_2, %c0_3] : memref<8x256xf32, #tpu.memory_space<vmem>>, vector<8x256xf32>
    %c0_4 = arith.constant 0 : index
    %c0_5 = arith.constant 0 : index
    %5 = vector.load %arg5[%c0_4, %c0_5] : memref<256x256xf32, #tpu.memory_space<vmem>>, vector<256x256xf32>
    %cst = arith.constant dense<0.000000e+00> : vector<8x256xf32>
    %6 = tpu.matmul %4, %5, %cst {dimension_numbers = #tpu.dot_dimension_numbers<[1], [1], [0], [0], [0, 0, 1, 0], [], []>} : vector<8x256xf32>, vector<256x256xf32>, vector<8x256xf32> -> vector<8x256xf32>
    %7 = arith.addf %3, %6 : vector<8x256xf32>
    %c0_6 = arith.constant 0 : index
    %c0_7 = arith.constant 0 : index
    %8 = vector.load %arg7[%c0_6, %c0_7] : memref<8x256xf32, #tpu.memory_space<vmem>>, vector<8x256xf32>
    tpu.vector_store %arg7[%c0_6, %c0_7], %7 {strides = array<i32>} : memref<8x256xf32, #tpu.memory_space<vmem>>, vector<8x256xf32>,
    %c0_i32_8 = arith.constant 0 : i32
    %9 = arith.cmpi eq, %arg2, %c0_i32_8 : i32
    %10 = arith.extui %9 : i1 to i32
    %c0_i32_9 = arith.constant 0 : i32
    %11 = arith.cmpi ne, %10, %c0_i32_9 : i32
    scf.if %11 {
      %c0_10 = arith.constant 0 : index
      %c0_11 = arith.constant 0 : index
      %12 = memref.load %arg3[%c0_10, %c0_11] : memref<1x1xf32, #tpu.memory_space<smem>>
      %c0_12 = arith.constant 0 : index
      %c0_13 = arith.constant 0 : index
      %13 = vector.load %arg7[%c0_12, %c0_13] : memref<8x256xf32, #tpu.memory_space<vmem>>, vector<8x256xf32>
      %14 = vector.broadcast %12 : f32 to vector<8x256xf32>
      %15 = arith.mulf %13, %14 : vector<8x256xf32>
      %c0_14 = arith.constant 0 : index
      %c0_15 = arith.constant 0 : index
      %16 = vector.load %arg6[%c0_14, %c0_15] : memref<1x256xf32, #tpu.memory_space<vmem>>, vector<1x256xf32>
      %17 = vector.broadcast %16 : vector<1x256xf32> to vector<8x256xf32>
      %18 = arith.addf %15, %17 : vector<8x256xf32>
      %c0_16 = arith.constant 0 : index
      %c0_17 = arith.constant 0 : index
      %19 = vector.load %arg7[%c0_16, %c0_17] : memref<8x256xf32, #tpu.memory_space<vmem>>, vector<8x256xf32>
      tpu.vector_store %arg7[%c0_16, %c0_17], %18 {strides = array<i32>} : memref<8x256xf32, #tpu.memory_space<vmem>>, vector<8x256xf32>,
    } else {
    }
    return
  }
  func.func @transform_0(%arg0: i32, %arg1: i32, %arg2: i32) -> (i32, i32) {
    %c0_i32 = arith.constant 0 : i32
    %c0_i32_0 = arith.constant 0 : i32
    %c0_i32_1 = arith.constant 0 : i32
    return %c0_i32, %c0_i32_0 : i32, i32
  }
  func.func @transform_1(%arg0: i32, %arg1: i32, %arg2: i32) -> (i32, i32) {
    %c0_i32 = arith.constant 0 : i32
    return %arg0, %arg2 : i32, i32
  }
  func.func @transform_2(%arg0: i32, %arg1: i32, %arg2: i32) -> (i32, i32) {
    %c0_i32 = arith.constant 0 : i32
    return %arg1, %arg2 : i32, i32
  }
  func.func @transform_3(%arg0: i32, %arg1: i32, %arg2: i32) -> (i32, i32) {
    %c0_i32 = arith.constant 0 : i32
    %c0_i32_0 = arith.constant 0 : i32
    return %c0_i32, %arg1 : i32, i32
  }
  func.func @transform_4(%arg0: i32, %arg1: i32, %arg2: i32) -> (i32, i32) {
    %c0_i32 = arith.constant 0 : i32
    return %arg0, %arg1 : i32, i32
  }
}

</mosaic_0001>

<llo_original>
// kernel: spectral_norm_linear.2
$region0: #{spectral_norm_linear.2}
  #allocation0 [shape = 'u32[]', space=smem, size = 0x4, offset = 0x4, fixed_abs, tag = 'smem constant byte address 0x4 - core index']
  #allocation1 [shape = 'u32[144,128]{1,0:T(1,128)}', space=vmem, size = 0x12000, scoped, tag = 'internal scratch']
  %s0 = inlined_call_operand.hbm [shape: f32[16,32], index: 0, kind: input, shape index: {}]
  %s1 = inlined_call_operand.vmem [shape: f32[1,16], index: 1, kind: input, shape index: {}]
  %s2 = inlined_call_operand.hbm [shape: f32[1,16], index: 2, kind: output, shape index: {0}]
  %s3 = inlined_call_operand.hbm [shape: f32[1,32], index: 3, kind: output, shape index: {1}]
  %s4 = inlined_call_operand.hbm [shape: f32[1,1], index: 4, kind: output, shape index: {2}]
  %s5 = inlined_call_operand.hbm [shape: f32[1,1], index: 5, kind: output, shape index: {3}]
  %6 = xla_tuple %s2, %s3, %s4, %s5
  %s7 = sld [smem:[#allocation0]]
  $region46: #{spectral_norm_linear.2} parent=0
    _
  %s9 = ssub.s32 1, %s7
  %s10 = scalar_select 0, %s9, %s7
  $region1: #{spectral_norm_linear.2} parent=0
    #allocation2 [shape = 'u8[8192]{0}', space=vmem, size = 0x2000, scoped, tag = 'input window, operand 0, single buffered']
    #allocation3 [shape = 's32[1]{0}', space=sflag, size = 0x4, scoped, tag = 'scoped memory for spectral_norm_linear.2']
    #allocation4 [shape = 's32[1]{0}', space=sflag, size = 0x4, scoped, tag = 'scoped memory for spectral_norm_linear.2']
    #allocation5 [shape = 'u8[512]{0}', space=vmem, size = 0x400, scoped, tag = 'output window, operand 0, single buffered']
    #allocation6 [shape = 'u8[512]{0}', space=vmem, size = 0x400, scoped, tag = 'output window, operand 1, single buffered']
    #allocation7 [shape = 's32[1]{0}', space=sflag, size = 0x4, scoped, tag = 'scoped memory for spectral_norm_linear.2']
    #allocation8 [shape = 'u8[512]{0}', space=vmem, size = 0x400, scoped, tag = 'output window, operand 2, single buffered']
    #allocation9 [shape = 'u8[512]{0}', space=vmem, size = 0x400, scoped, tag = 'output window, operand 3, single buffered']
    #allocation10 [shape = 's32[1]{0}', space=sflag, size = 0x4, scoped, tag = 'scoped memory for spectral_norm_linear.2']
    %11 = vsyncpa [#allocation3], 0
    %12 = vsyncpa [#allocation4], 0
    %13 = vsyncpa [#allocation7], 0
    %14 = vsyncpa [#allocation10], 0
    // Predicated region
    $region2: #{spectral_norm_linear.2} parent=1 // pred_check
      _
    $region3: #{spectral_norm_linear.2} parent=1 // pred_check_branch
      %16 = sbr.rel (0) target = $region5
    $region4: #{spectral_norm_linear.2} parent=1 // pred_region
      %s18 = ssub.s32 256, 256
      %19 = vsyncadd [#allocation3], %s18
      %s20 = sshll.u32 [#allocation2], 4
      %s21 = int_to_ptr.vmem [resolvable:$true] %s20
      %26 = dma.hbm_to_vmem [thread:$0]  %s0, 256, %s21, [#allocation3], 128, 128, 8
    $region5: #{spectral_norm_linear.2} parent=1 // pred_fallthru
      _
    // Predicated region
    $region6: #{spectral_norm_linear.2} parent=1 // pred_check
      _
    $region7: #{spectral_norm_linear.2} parent=1 // pred_check_branch
      %28 = sbr.rel (0) target = $region9
    $region8: #{spectral_norm_linear.2} parent=1 // pred_region
      _
    $region9: #{spectral_norm_linear.2} parent=1 // pred_fallthru
      _
    // Predicated region
    $region10: #{spectral_norm_linear.2} parent=1 // pred_check
      _
    $region11: #{spectral_norm_linear.2} parent=1 // pred_check_branch
      %30 = sbr.rel (0) target = $region13
    $region12: #{spectral_norm_linear.2} parent=1 // pred_region
      %31 = dma.done [#allocation3], 256
    $region13: #{spectral_norm_linear.2} parent=1 // pred_fallthru
      _
    %v32 = vld [vmem:[#allocation2] sm:$0xff]
    %v33 = vld [vmem:[#allocation2 + $0x8] sm:$0xff]
    %v34 = vld [vmem:[%s1] sm:$0x1]
    %vm35 = vcmask 130048
    %v37 = vsel %vm35, %v34, 0
    %39 = vmatprep.subr.mxu0 0.0
    %40 = vmatpush1.msra.mxu0 %v32
    %41 = vmatprep.subr.mxu0 0.0
    %42 = vmatpush1.msra.mxu0 %v33
    %43 = vmatprep.subr.mxu0 0.0
    %44 = vmatpush1.msra.mxu0 0.0
    %45 = vmatprep.subr.mxu0 0.0
    %46 = vmatpush1.msra.mxu0 0.0
    %47 = vmatprep.subr.mxu0 0.0
    %48 = vmatpush1.msra.mxu0 0.0
    %49 = vmatprep.subr.mxu0 0.0
    %50 = vmatpush1.msra.mxu0 0.0
    %51 = vmatprep.subr.mxu0 0.0
    %52 = vmatpush1.msra.mxu0 0.0
    %53 = vmatprep.subr.mxu0 0.0
    %54 = vmatpush1.msra.mxu0 0.0
    %55 = vmatprep.subr.mxu0 0.0
    %56 = vmatpush1.msra.mxu0 0.0
    %57 = vmatprep.subr.mxu0 0.0
    %58 = vmatpush1.msra.mxu0 0.0
    %59 = vmatprep.subr.mxu0 0.0
    %60 = vmatpush1.msra.mxu0 0.0
    %61 = vmatprep.subr.mxu0 0.0
    %62 = vmatpush1.msra.mxu0 0.0
    %63 = vmatprep.subr.mxu0 0.0
    %64 = vmatpush1.msra.mxu0 0.0
    %65 = vmatprep.subr.mxu0 0.0
    %66 = vmatpush1.msra.mxu0 0.0
    %67 = vmatprep.subr.mxu0 0.0
    %68 = vmatpush1.msra.mxu0 0.0
    %69 = vmatprep.subr.mxu0 0.0
    %70 = vmatpush1.msra.mxu0 0.0
    %71 = vmatprep.subr.mxu0 0.0
    %72 = vmatpush1.msra.mxu0 0.0
    %73 = vmatprep.subr.mxu0 0.0
    %74 = vmatpush1.msra.mxu0 0.0
    %75 = vmatprep.subr.mxu0 0.0
    %76 = vmatpush1.msra.mxu0 0.0
    %77 = vmatprep.subr.mxu0 0.0
    %78 = vmatpush1.msra.mxu0 0.0
    %79 = vmatprep.subr.mxu0 0.0
    %80 = vmatpush1.msra.mxu0 0.0
    %81 = vmatprep.subr.mxu0 0.0
    %82 = vmatpush1.msra.mxu0 0.0
    %83 = vmatprep.subr.mxu0 0.0
    %84 = vmatpush1.msra.mxu0 0.0
    %85 = vmatprep.subr.mxu0 0.0
    %86 = vmatpush1.msra.mxu0 0.0
    %87 = vmatprep.subr.mxu0 0.0
    %88 = vmatpush1.msra.mxu0 0.0
    %89 = vmatprep.subr.mxu0 0.0
    %90 = vmatpush1.msra.mxu0 0.0
    %91 = vmatprep.subr.mxu0 0.0
    %92 = vmatpush1.msra.mxu0 0.0
    %93 = vmatprep.subr.mxu0 0.0
    %94 = vmatpush1.msra.mxu0 0.0
    %95 = vmatprep.subr.mxu0 0.0
    %96 = vmatpush1.msra.mxu0 0.0
    %97 = vmatprep.subr.mxu0 0.0
    %98 = vmatpush1.msra.mxu0 0.0
    %99 = vmatprep.subr.mxu0 0.0
    %100 = vmatpush1.msra.mxu0 0.0
    %101 = vmatprep.subr.mxu0 0.0
    %102 = vmatpush1.msra.mxu0 0.0
    %103 = vmatprep.mubr.f32.mxu0 0.0
    %104 = vmatmul.mubr.f32.gmra.mrb[0].mxu0 %v37
    %v105 = vpop.f32.mrb[0].mxu0
    %v106 = vadd.f32 0.0, %v105
    %v107 = vpop.f32.mrb[0].mxu0
    %108 = vdwg.mxu0
    %v109 = vmul.f32 %v106, %v106
    %vm110 = vcmask 253952
    %v111 = vsel %vm110, %v109, 0.0
    %112 = vadd.xlane.f32.xlu0 %v111
    %v113 = vpop.xlane.xlu0 %112
    %v114 = vrot.slane %v113, 4
    %v115 = vadd.f32 %v113, %v114
    %v116 = vrot.slane %v115, 2
    %v117 = vadd.f32 %v115, %v116
    %v118 = vrot.slane %v117, 1
    %v119 = vadd.f32 %v117, %v118
    %s120 = vtos %v119
    %v121 = vstv %s120
    %v122 = vrsqrt.pop %v121
    %v123 = vmul.f32 %v121, %v122
    %vm124 = vcmp.eq.f32.partialorder %v121, inf
    %v125 = vsel %vm124, %v121, %v123
    %vm126 = vcmp.eq.f32.partialorder %v121, 0.0
    %v127 = vand.u32 %v121, 2147483648
    %v128 = vsel %vm126, %v127, %v125
    %s129 = vtos %v128
    %s130 = sadd.f32 %s129, 1e-12
    %v131 = vstv %s130
    %v132 = vrcp.pop %v131
    %s133 = vtos %v132
    %v134 = vstv %s133
    %v135 = vmul.f32 %v106, %v134
    %vm136 = vcmask 261120
    %v138 = vsel %vm136, %v135, 0
    %v141 = vsel %vm136, %v32, 0
    %v144 = vsel %vm136, %v33, 0
    %146 = vmatprep.subr.mxu0 0.0
    %147 = vmatpush1.xpose.msra.mxu0 %v141
    %148 = vmatprep.subr.mxu0 0.0
    %149 = vmatpush1.xpose.msra.mxu0 %v144
    %150 = vmatprep.subr.mxu0 0.0
    %151 = vmatpush1.xpose.msra.mxu0 0.0
    %152 = vmatprep.subr.mxu0 0.0
    %153 = vmatpush1.xpose.msra.mxu0 0.0
    %154 = vmatprep.subr.mxu0 0.0
    %155 = vmatpush1.xpose.msra.mxu0 0.0
    %156 = vmatprep.subr.mxu0 0.0
    %157 = vmatpush1.xpose.msra.mxu0 0.0
    %158 = vmatprep.subr.mxu0 0.0
    %159 = vmatpush1.xpose.msra.mxu0 0.0
    %160 = vmatprep.subr.mxu0 0.0
    %161 = vmatpush1.xpose.msra.mxu0 0.0
    %162 = vmatprep.subr.mxu0 0.0
    %163 = vmatpush1.xpose.msra.mxu0 0.0
    %164 = vmatprep.subr.mxu0 0.0
    %165 = vmatpush1.xpose.msra.mxu0 0.0
    %166 = vmatprep.subr.mxu0 0.0
    %167 = vmatpush1.xpose.msra.mxu0 0.0
    %168 = vmatprep.subr.mxu0 0.0
    %169 = vmatpush1.xpose.msra.mxu0 0.0
    %170 = vmatprep.subr.mxu0 0.0
    %171 = vmatpush1.xpose.msra.mxu0 0.0
    %172 = vmatprep.subr.mxu0 0.0
    %173 = vmatpush1.xpose.msra.mxu0 0.0
    %174 = vmatprep.subr.mxu0 0.0
    %175 = vmatpush1.xpose.msra.mxu0 0.0
    %176 = vmatprep.subr.mxu0 0.0
    %177 = vmatpush1.xpose.msra.mxu0 0.0
    %178 = vmatprep.subr.mxu0 0.0
    %179 = vmatpush1.xpose.msra.mxu0 0.0
    %180 = vmatprep.subr.mxu0 0.0
    %181 = vmatpush1.xpose.msra.mxu0 0.0
    %182 = vmatprep.subr.mxu0 0.0
    %183 = vmatpush1.xpose.msra.mxu0 0.0
    %184 = vmatprep.subr.mxu0 0.0
    %185 = vmatpush1.xpose.msra.mxu0 0.0
    %186 = vmatprep.subr.mxu0 0.0
    %187 = vmatpush1.xpose.msra.mxu0 0.0
    %188 = vmatprep.subr.mxu0 0.0
    %189 = vmatpush1.xpose.msra.mxu0 0.0
    %190 = vmatprep.subr.mxu0 0.0
    %191 = vmatpush1.xpose.msra.mxu0 0.0
    %192 = vmatprep.subr.mxu0 0.0
    %193 = vmatpush1.xpose.msra.mxu0 0.0
    %194 = vmatprep.subr.mxu0 0.0
    %195 = vmatpush1.xpose.msra.mxu0 0.0
    %196 = vmatprep.subr.mxu0 0.0
    %197 = vmatpush1.xpose.msra.mxu0 0.0
    %198 = vmatprep.subr.mxu0 0.0
    %199 = vmatpush1.xpose.msra.mxu0 0.0
    %200 = vmatprep.subr.mxu0 0.0
    %201 = vmatpush1.xpose.msra.mxu0 0.0
    %202 = vmatprep.subr.mxu0 0.0
    %203 = vmatpush1.xpose.msra.mxu0 0.0
    %204 = vmatprep.subr.mxu0 0.0
    %205 = vmatpush1.xpose.msra.mxu0 0.0
    %206 = vmatprep.subr.mxu0 0.0
    %207 = vmatpush1.xpose.msra.mxu0 0.0
    %208 = vmatprep.subr.mxu0 0.0
    %209 = vmatpush1.xpose.msra.mxu0 0.0
    %210 = vmatprep.mubr.f32.mxu0 0.0
    %211 = vmatmul.mubr.f32.gmra.mrb[0].mxu0 %v138
    %v212 = vpop.f32.mrb[0].mxu0
    %v213 = vadd.f32 0.0, %v212
    %v214 = vpop.f32.mrb[0].mxu0
    %215 = vdwg.mxu0
    %v216 = vmul.f32 %v213, %v213
    %vm217 = vcmask 122880
    %v218 = vsel %vm217, %v216, 0.0
    %219 = vadd.xlane.f32.xlu0 %v218
    %v220 = vpop.xlane.xlu0 %219
    %v221 = vrot.slane %v220, 4
    %v222 = vadd.f32 %v220, %v221
    %v223 = vrot.slane %v222, 2
    %v224 = vadd.f32 %v222, %v223
    %v225 = vrot.slane %v224, 1
    %v226 = vadd.f32 %v224, %v225
    %s227 = vtos %v226
    %v228 = vstv %s227
    %v229 = vrsqrt.pop %v228
    %v230 = vmul.f32 %v228, %v229
    %vm231 = vcmp.eq.f32.partialorder %v228, inf
    %v232 = vsel %vm231, %v228, %v230
    %vm233 = vcmp.eq.f32.partialorder %v228, 0.0
    %v234 = vand.u32 %v228, 2147483648
    %v235 = vsel %vm233, %v234, %v232
    %s236 = vtos %v235
    %s237 = sadd.f32 %s236, 1e-12
    %v238 = vstv %s237
    %v239 = vrcp.pop %v238
    %s240 = vtos %v239
    %v241 = vstv %s240
    %v242 = vmul.f32 %v213, %v241
    %s243 = smul.f32 %s227, %s240
    %v244 = vstv %s243
    %v245 = vrcp.pop %v244
    %s246 = vtos %v245
    %247 = vst.msk [vmem:[#allocation5] sm:$0x1] %vm217, %v242
    %248 = vst.msk [vmem:[#allocation6] sm:$0x1] %vm110, %v135
    %v249 = vstv %s243
    %vm250 = vcmask 0
    %251 = vst.msk [vmem:[#allocation8] sm:$0x1] %vm250, %v249
    %v252 = vstv %s246
    %253 = vst.msk [vmem:[#allocation9] sm:$0x1] %vm250, %v252
    // Predicated region
    $region14: #{spectral_norm_linear.2} parent=1 // pred_check
      _
    $region15: #{spectral_norm_linear.2} parent=1 // pred_check_branch
      %255 = sbr.rel (0) target = $region17
    $region16: #{spectral_norm_linear.2} parent=1 // pred_region
      %s257 = ssub.s32 16, 16
      %258 = vsyncadd [#allocation4], %s257
      %s260 = sshll.u32 [#allocation5], 4
      %s261 = int_to_ptr.vmem [resolvable:$true] %s260
      %263 = dma.vmem_to_hbm [thread:$0]  %s261, 16, %s2, [#allocation4]
    $region17: #{spectral_norm_linear.2} parent=1 // pred_fallthru
      _
    // Predicated region
    $region18: #{spectral_norm_linear.2} parent=1 // pred_check
      _
    $region19: #{spectral_norm_linear.2} parent=1 // pred_check_branch
      %265 = sbr.rel (0) target = $region21
    $region20: #{spectral_norm_linear.2} parent=1 // pred_region
      %s267 = ssub.s32 16, 16
      %268 = vsyncadd [#allocation7], %s267
      %s270 = sshll.u32 [#allocation6], 4
      %s271 = int_to_ptr.vmem [resolvable:$true] %s270
      %273 = dma.vmem_to_hbm [thread:$0]  %s271, 16, %s3, [#allocation7]
    $region21: #{spectral_norm_linear.2} parent=1 // pred_fallthru
      _
    // Predicated region
    $region22: #{spectral_norm_linear.2} parent=1 // pred_check
      _
    $region23: #{spectral_norm_linear.2} parent=1 // pred_check_branch
      %275 = sbr.rel (0) target = $region25
    $region24: #{spectral_norm_linear.2} parent=1 // pred_region
      %s277 = ssub.s32 16, 16
      %278 = vsyncadd [#allocation7], %s277
      %s280 = sshll.u32 [#allocation8], 4
      %s281 = int_to_ptr.vmem [resolvable:$true] %s280
      %283 = dma.vmem_to_hbm [thread:$0]  %s281, 16, %s4, [#allocation7]
    $region25: #{spectral_norm_linear.2} parent=1 // pred_fallthru
      _
    // Predicated region
    $region26: #{spectral_norm_linear.2} parent=1 // pred_check
      _
    $region27: #{spectral_norm_linear.2} parent=1 // pred_check_branch
      %285 = sbr.rel (0) target = $region29
    $region28: #{spectral_norm_linear.2} parent=1 // pred_region
      %s287 = ssub.s32 16, 16
      %288 = vsyncadd [#allocation10], %s287
      %s290 = sshll.u32 [#allocation9], 4
      %s291 = int_to_ptr.vmem [resolvable:$true] %s290
      %293 = dma.vmem_to_hbm [thread:$0]  %s291, 16, %s5, [#allocation10]
    $region29: #{spectral_norm_linear.2} parent=1 // pred_fallthru
      _
    // Predicated region
    $region30: #{spectral_norm_linear.2} parent=1 // pred_check
      _
    $region31: #{spectral_norm_linear.2} parent=1 // pred_check_branch
      %295 = sbr.rel (0) target = $region33
    $region32: #{spectral_norm_linear.2} parent=1 // pred_region
      %296 = dma.done [#allocation4], 16
    $region33: #{spectral_norm_linear.2} parent=1 // pred_fallthru
      _
    // Predicated region
    $region34: #{spectral_norm_linear.2} parent=1 // pred_check
      _
    $region35: #{spectral_norm_linear.2} parent=1 // pred_check_branch
      %298 = sbr.rel (0) target = $region37
    $region36: #{spectral_norm_linear.2} parent=1 // pred_region
      %299 = dma.done [#allocation7], 16
    $region37: #{spectral_norm_linear.2} parent=1 // pred_fallthru
      _
    // Predicated region
    $region38: #{spectral_norm_linear.2} parent=1 // pred_check
      _
    $region39: #{spectral_norm_linear.2} parent=1 // pred_check_branch
      %301 = sbr.rel (0) target = $region41
    $region40: #{spectral_norm_linear.2} parent=1 // pred_region
      %302 = dma.done [#allocation7], 16
    $region41: #{spectral_norm_linear.2} parent=1 // pred_fallthru
      _
    // Predicated region
    $region42: #{spectral_norm_linear.2} parent=1 // pred_check
      _
    $region43: #{spectral_norm_linear.2} parent=1 // pred_check_branch
      %304 = sbr.rel (0) target = $region45
    $region44: #{spectral_norm_linear.2} parent=1 // pred_region
      %305 = dma.done [#allocation10], 16
    $region45: #{spectral_norm_linear.2} parent=1 // pred_fallthru
      _
    %306 = vsyncpa [#allocation3], 1
    %307 = vsyncpa [#allocation4], 1
    %308 = vsyncpa [#allocation7], 1
    %309 = vsyncpa [#allocation10], 1

// kernel: spectral_norm_linear.3
$region0: #{spectral_norm_linear.3}
  #allocation0 [shape = 'u32[]', space=smem, size = 0x4, offset = 0x4, fixed_abs, tag = 'smem constant byte address 0x4 - core index']
  #allocation1 [shape = 'u32[144,128]{1,0:T(1,128)}', space=vmem, size = 0x12000, scoped, tag = 'internal scratch']
  #allocation2 [shape = 'f32[1,1]{1,0:T(1,128)S(6)}', space=smem, size = 0x200, scoped, tag = 'scoped memory for spectral_norm_linear.3']
  %s0 = inlined_call_operand.<no memory space> [shape: f32[1,1], index: 0, kind: input, shape index: {}]
  %s1 = inlined_call_operand.vmem [shape: f32[8,256], index: 1, kind: input, shape index: {}]
  %s2 = inlined_call_operand.vmem [shape: f32[256,256], index: 2, kind: input, shape index: {}]
  %s3 = inlined_call_operand.vmem [shape: f32[1,256], index: 3, kind: input, shape index: {}]
  %s4 = inlined_call_operand.vmem [shape: f32[8,256], index: 4, kind: output, shape index: {}]
  %s5 = sld [smem:[#allocation0]]
  $region34: #{spectral_norm_linear.3} parent=0
    _
  %s7 = ssub.s32 1, %s5
  %s8 = scalar_select 0, %s7, %s5
  %9 = sst [smem:[#allocation2]] %s0
  // Predicated region
  $region2: #{spectral_norm_linear.3} parent=0 // pred_check
    _
  $region3: #{spectral_norm_linear.3} parent=0 // pred_check_branch
    %11 = sbr.rel (0) target = $region5
  $region4: #{spectral_norm_linear.3} parent=0 // pred_region
    _
  $region5: #{spectral_norm_linear.3} parent=0 // pred_fallthru
    _
  // Predicated region
  $region6: #{spectral_norm_linear.3} parent=0 // pred_check
    _
  $region7: #{spectral_norm_linear.3} parent=0 // pred_check_branch
    %13 = sbr.rel (0) target = $region9
  $region8: #{spectral_norm_linear.3} parent=0 // pred_region
    _
  $region9: #{spectral_norm_linear.3} parent=0 // pred_fallthru
    _
  // Predicated region
  $region10: #{spectral_norm_linear.3} parent=0 // pred_check
    _
  $region11: #{spectral_norm_linear.3} parent=0 // pred_check_branch
    %15 = sbr.rel (0) target = $region13
  $region12: #{spectral_norm_linear.3} parent=0 // pred_region
    _
  $region13: #{spectral_norm_linear.3} parent=0 // pred_fallthru
    _
  // Predicated region
  $region14: #{spectral_norm_linear.3} parent=0 // pred_check
    _
  $region15: #{spectral_norm_linear.3} parent=0 // pred_check_branch
    %17 = sbr.rel (0) target = $region17
  $region16: #{spectral_norm_linear.3} parent=0 // pred_region
    _
  $region17: #{spectral_norm_linear.3} parent=0 // pred_fallthru
    _
  %p18 = scmp.eq.s32.totalorder 0, 0
  // Predicated region
  $region18: #{spectral_norm_linear.3} parent=0 // pred_check
    %p19 = pneg %p18
  $region19: #{spectral_norm_linear.3} parent=0 // pred_check_branch
    %21 = sbr.rel (%p19) target = $region21
  $region20: #{spectral_norm_linear.3} parent=0 // pred_region
    %22 = vst [vmem:[%s4] sm:$0xff] 0.0
    %23 = vst [vmem:[%s4 + $0x8] sm:$0xff] 0.0
  $region21: #{spectral_norm_linear.3} parent=0 // pred_fallthru
    _
  %v24 = vld [vmem:[%s4] sm:$0xff]
  %v25 = vld [vmem:[%s4 + $0x8] sm:$0xff]
  %v26 = vld [vmem:[%s1] sm:$0xff]
  %v27 = vld [vmem:[%s1 + $0x8] sm:$0xff]
  %v28 = vld [vmem:[%s2] sm:$0xff]
  %v29 = vld [vmem:[%s2 + $0x8] sm:$0xff]
  %v30 = vld [vmem:[%s2 + $0x10] sm:$0xff]
  %v31 = vld [vmem:[%s2 + $0x18] sm:$0xff]
  %v32 = vld [vmem:[%s2 + $0x20] sm:$0xff]
  %v33 = vld [vmem:[%s2 + $0x28] sm:$0xff]
  %v34 = vld [vmem:[%s2 + $0x30] sm:$0xff]
  %v35 = vld [vmem:[%s2 + $0x38] sm:$0xff]
  %v36 = vld [vmem:[%s2 + $0x40] sm:$0xff]
  %v37 = vld [vmem:[%s2 + $0x48] sm:$0xff]
  %v38 = vld [vmem:[%s2 + $0x50] sm:$0xff]
  %v39 = vld [vmem:[%s2 + $0x58] sm:$0xff]
  %v40 = vld [vmem:[%s2 + $0x60] sm:$0xff]
  %v41 = vld [vmem:[%s2 + $0x68] sm:$0xff]
  %v42 = vld [vmem:[%s2 + $0x70] sm:$0xff]
  %v43 = vld [vmem:[%s2 + $0x78] sm:$0xff]
  %v44 = vld [vmem:[%s2 + $0x80] sm:$0xff]
  %v45 = vld [vmem:[%s2 + $0x88] sm:$0xff]
  %v46 = vld [vmem:[%s2 + $0x90] sm:$0xff]
  %v47 = vld [vmem:[%s2 + $0x98] sm:$0xff]
  %v48 = vld [vmem:[%s2 + $0xa0] sm:$0xff]
  %v49 = vld [vmem:[%s2 + $0xa8] sm:$0xff]
  %v50 = vld [vmem:[%s2 + $0xb0] sm:$0xff]
  %v51 = vld [vmem:[%s2 + $0xb8] sm:$0xff]
  %v52 = vld [vmem:[%s2 + $0xc0] sm:$0xff]
  %v53 = vld [vmem:[%s2 + $0xc8] sm:$0xff]
  %v54 = vld [vmem:[%s2 + $0xd0] sm:$0xff]
  %v55 = vld [vmem:[%s2 + $0xd8] sm:$0xff]
  %v56 = vld [vmem:[%s2 + $0xe0] sm:$0xff]
  %v57 = vld [vmem:[%s2 + $0xe8] sm:$0xff]
  %v58 = vld [vmem:[%s2 + $0xf0] sm:$0xff]
  %v59 = vld [vmem:[%s2 + $0xf8] sm:$0xff]
  %v60 = vld [vmem:[%s2 + $0x100] sm:$0xff]
  %v61 = vld [vmem:[%s2 + $0x108] sm:$0xff]
  %v62 = vld [vmem:[%s2 + $0x110] sm:$0xff]
  %v63 = vld [vmem:[%s2 + $0x118] sm:$0xff]
  %v64 = vld [vmem:[%s2 + $0x120] sm:$0xff]
  %v65 = vld [vmem:[%s2 + $0x128] sm:$0xff]
  %v66 = vld [vmem:[%s2 + $0x130] sm:$0xff]
  %v67 = vld [vmem:[%s2 + $0x138] sm:$0xff]
  %v68 = vld [vmem:[%s2 + $0x140] sm:$0xff]
  %v69 = vld [vmem:[%s2 + $0x148] sm:$0xff]
  %v70 = vld [vmem:[%s2 + $0x150] sm:$0xff]
  %v71 = vld [vmem:[%s2 + $0x158] sm:$0xff]
  %v72 = vld [vmem:[%s2 + $0x160] sm:$0xff]
  %v73 = vld [vmem:[%s2 + $0x168] sm:$0xff]
  %v74 = vld [vmem:[%s2 + $0x170] sm:$0xff]
  %v75 = vld [vmem:[%s2 + $0x178] sm:$0xff]
  %v76 = vld [vmem:[%s2 + $0x180] sm:$0xff]
  %v77 = vld [vmem:[%s2 + $0x188] sm:$0xff]
  %v78 = vld [vmem:[%s2 + $0x190] sm:$0xff]
  %v79 = vld [vmem:[%s2 + $0x198] sm:$0xff]
  %v80 = vld [vmem:[%s2 + $0x1a0] sm:$0xff]
  %v81 = vld [vmem:[%s2 + $0x1a8] sm:$0xff]
  %v82 = vld [vmem:[%s2 + $0x1b0] sm:$0xff]
  %v83 = vld [vmem:[%s2 + $0x1b8] sm:$0xff]
  %v84 = vld [vmem:[%s2 + $0x1c0] sm:$0xff]
  %v85 = vld [vmem:[%s2 + $0x1c8] sm:$0xff]
  %v86 = vld [vmem:[%s2 + $0x1d0] sm:$0xff]
  %v87 = vld [vmem:[%s2 + $0x1d8] sm:$0xff]
  %v88 = vld [vmem:[%s2 + $0x1e0] sm:$0xff]
  %v89 = vld [vmem:[%s2 + $0x1e8] sm:$0xff]
  %v90 = vld [vmem:[%s2 + $0x1f0] sm:$0xff]
  %v91 = vld [vmem:[%s2 + $0x1f8] sm:$0xff]
  %92 = vmatprep.subr.mxu0 %v29
  %93 = vmatpush1.xpose.msra.mxu0 %v28
  %94 = vmatprep.subr.mxu0 %v31
  %95 = vmatpush1.xpose.msra.mxu0 %v30
  %96 = vmatprep.subr.mxu0 %v33
  %97 = vmatpush1.xpose.msra.mxu0 %v32
  %98 = vmatprep.subr.mxu0 %v35
  %99 = vmatpush1.xpose.msra.mxu0 %v34
  %100 = vmatprep.subr.mxu0 %v37
  %101 = vmatpush1.xpose.msra.mxu0 %v36
  %102 = vmatprep.subr.mxu0 %v39
  %103 = vmatpush1.xpose.msra.mxu0 %v38
  %104 = vmatprep.subr.mxu0 %v41
  %105 = vmatpush1.xpose.msra.mxu0 %v40
  %106 = vmatprep.subr.mxu0 %v43
  %107 = vmatpush1.xpose.msra.mxu0 %v42
  %108 = vmatprep.subr.mxu0 %v45
  %109 = vmatpush1.xpose.msra.mxu0 %v44
  %110 = vmatprep.subr.mxu0 %v47
  %111 = vmatpush1.xpose.msra.mxu0 %v46
  %112 = vmatprep.subr.mxu0 %v49
  %113 = vmatpush1.xpose.msra.mxu0 %v48
  %114 = vmatprep.subr.mxu0 %v51
  %115 = vmatpush1.xpose.msra.mxu0 %v50
  %116 = vmatprep.subr.mxu0 %v53
  %117 = vmatpush1.xpose.msra.mxu0 %v52
  %118 = vmatprep.subr.mxu0 %v55
  %119 = vmatpush1.xpose.msra.mxu0 %v54
  %120 = vmatprep.subr.mxu0 %v57
  %121 = vmatpush1.xpose.msra.mxu0 %v56
  %122 = vmatprep.subr.mxu0 %v59
  %123 = vmatpush1.xpose.msra.mxu0 %v58
  %124 = vmatprep.subr.mxu0 %v61
  %125 = vmatpush1.xpose.msra.mxu0 %v60
  %126 = vmatprep.subr.mxu0 %v63
  %127 = vmatpush1.xpose.msra.mxu0 %v62
  %128 = vmatprep.subr.mxu0 %v65
  %129 = vmatpush1.xpose.msra.mxu0 %v64
  %130 = vmatprep.subr.mxu0 %v67
  %131 = vmatpush1.xpose.msra.mxu0 %v66
  %132 = vmatprep.subr.mxu0 %v69
  %133 = vmatpush1.xpose.msra.mxu0 %v68
  %134 = vmatprep.subr.mxu0 %v71
  %135 = vmatpush1.xpose.msra.mxu0 %v70
  %136 = vmatprep.subr.mxu0 %v73
  %137 = vmatpush1.xpose.msra.mxu0 %v72
  %138 = vmatprep.subr.mxu0 %v75
  %139 = vmatpush1.xpose.msra.mxu0 %v74
  %140 = vmatprep.subr.mxu0 %v77
  %141 = vmatpush1.xpose.msra.mxu0 %v76
  %142 = vmatprep.subr.mxu0 %v79
  %143 = vmatpush1.xpose.msra.mxu0 %v78
  %144 = vmatprep.subr.mxu0 %v81
  %145 = vmatpush1.xpose.msra.mxu0 %v80
  %146 = vmatprep.subr.mxu0 %v83
  %147 = vmatpush1.xpose.msra.mxu0 %v82
  %148 = vmatprep.subr.mxu0 %v85
  %149 = vmatpush1.xpose.msra.mxu0 %v84
  %150 = vmatprep.subr.mxu0 %v87
  %151 = vmatpush1.xpose.msra.mxu0 %v86
  %152 = vmatprep.subr.mxu0 %v89
  %153 = vmatpush1.xpose.msra.mxu0 %v88
  %154 = vmatprep.subr.mxu0 %v91
  %155 = vmatpush1.xpose.msra.mxu0 %v90
  %156 = vmatprep.mubr.f32.mxu0 %v27
  %157 = vmatmul.mubr.f32.gmra.mrb[0].mxu0 %v26
  %v158 = vpop.f32.mrb[0].mxu0
  %v159 = vadd.f32 0.0, %v158
  %v160 = vpop.f32.mrb[0].mxu0
  %v161 = vadd.f32 0.0, %v160
  %162 = vdwg.mxu0
  %v163 = vadd.f32 %v24, %v159
  %v164 = vadd.f32 %v25, %v161
  %165 = vst [vmem:[%s4] sm:$0xff] %v163
  %166 = vst [vmem:[%s4 + $0x8] sm:$0xff] %v164
  // Predicated region
  $region22: #{spectral_norm_linear.3} parent=0 // pred_check
    %p167 = pneg %p18
  $region23: #{spectral_norm_linear.3} parent=0 // pred_check_branch
    %169 = sbr.rel (%p167) target = $region25
  $region24: #{spectral_norm_linear.3} parent=0 // pred_region
    %s170 = sld [smem:[#allocation2]]
    %v171 = vld [vmem:[%s4] sm:$0xff]
    %v172 = vld [vmem:[%s4 + $0x8] sm:$0xff]
    %v173 = vstv %s170
    %v174 = vmul.f32 %v171, %v173
    %v175 = vmul.f32 %v172, %v173
    %v176 = vld [vmem:[%s3] sm:$0x3]
    %v178 = vlaneseq
    %v179 = vshrl.u32 %v178, 7
    %v180 = vsub.s32 0, %v179
    %v181 = vrot.slane %v176, %v180
    %v182 = vlaneseq
    %v183 = vshrl.u32 %v182, 7
    %v184 = vsub.s32 1, %v183
    %v185 = vrot.slane %v176, %v184
    %v188 = vadd.f32 %v174, %v181
    %v189 = vadd.f32 %v175, %v185
    %190 = vst [vmem:[%s4] sm:$0xff] %v188
    %191 = vst [vmem:[%s4 + $0x8] sm:$0xff] %v189
  $region25: #{spectral_norm_linear.3} parent=0 // pred_fallthru
    _
  // Predicated region
  $region26: #{spectral_norm_linear.3} parent=0 // pred_check
    _
  $region27: #{spectral_norm_linear.3} parent=0 // pred_check_branch
    %193 = sbr.rel (0) target = $region29
  $region28: #{spectral_norm_linear.3} parent=0 // pred_region
    _
  $region29: #{spectral_norm_linear.3} parent=0 // pred_fallthru
    _
  // Predicated region
  $region30: #{spectral_norm_linear.3} parent=0 // pred_check
    _
  $region31: #{spectral_norm_linear.3} parent=0 // pred_check_branch
    %195 = sbr.rel (0) target = $region33
  $region32: #{spectral_norm_linear.3} parent=0 // pred_region
    _
  $region33: #{spectral_norm_linear.3} parent=0 // pred_fallthru
    _

</llo_original>
